<compile_context>
chip_gen: v7x
topology: tpu7x:2x2x1
jax: 0.10.0
libtpu: 0.0.40
codegen_flags: <defaults>
</compile_context>

<pallas_src>
import jax
import jax.numpy as jnp
from jax.experimental import pallas as pl
from jax.experimental.pallas import tpu as pltpu

H_SIZE = 128
LN_EPS = 1e-5
LANE = 128


def _round_up(n, m):
    return ((n + m - 1) // m) * m


def _layernorm_onepass(x, gamma, beta):
    # Single-pass LayerNorm over the last axis (biased variance, matches
    # nn.LayerNorm), f32 math.  mean and E[x^2] are independent reductions.
    mean = jnp.mean(x, axis=-1, keepdims=True)
    msq = jnp.mean(x * x, axis=-1, keepdims=True)
    var = msq - mean * mean
    inv = jax.lax.rsqrt(var + LN_EPS)
    return (x - mean) * inv * gamma + beta


def _layernorm_ref(x, gamma, beta):
    # Centered two-pass form, for the pure-JAX reference only.
    mean = jnp.mean(x, axis=-1, keepdims=True)
    xc = x - mean
    var = jnp.mean(xc * xc, axis=-1, keepdims=True)
    inv = jax.lax.rsqrt(var + LN_EPS)
    return xc * inv * gamma + beta


def _make_mlp_kernel(o_size):
    """Kernel for one (tb, i_size) batch tile; all params VMEM-resident."""

    def kernel(x_ref, w1_ref, b1_ref, g1_ref, be1_ref,
               w2_ref, b2_ref, g2_ref, be2_ref,
               w3_ref, b3_ref, o_ref):
        # ---- Layer 1: Linear (bf16 MXU, f32 acc) -> LayerNorm -> ReLU ----
        h = jnp.dot(x_ref[...].astype(jnp.bfloat16), w1_ref[...],
                    preferred_element_type=jnp.float32) + b1_ref[...]
        h = _layernorm_onepass(h, g1_ref[...], be1_ref[...])
        h = jnp.maximum(h, 0.0)

        # ---- Layer 2: Linear (bf16 MXU, f32 acc) -> LayerNorm -> ReLU ----
        h = jnp.dot(h.astype(jnp.bfloat16), w2_ref[...],
                    preferred_element_type=jnp.float32) + b2_ref[...]
        h = _layernorm_onepass(h, g2_ref[...], be2_ref[...])
        h = jnp.maximum(h, 0.0)

        # ---- Output layer: Linear (bf16 MXU, f32 acc) -> Sigmoid ----
        # w3/b3 are zero-padded to a lane multiple; only first o_size are real.
        logits = jnp.dot(h.astype(jnp.bfloat16), w3_ref[...],
                         preferred_element_type=jnp.float32) + b3_ref[...]
        logits = logits[:, :o_size]
        # Exact sigmoid via a single EUP tanh (no approx-reciprocal overshoot).
        o_ref[...] = 0.5 * jnp.tanh(0.5 * logits) + 0.5

    return kernel


def mlp_forward(columns, params, *, block_b=1024):
    """columns: list of (B, 1) f32 feature columns (fn values then u values, in
    the module's concat order).  params: dict from init_params.
    Returns (B, o_size) f32."""
    n_cols = len(columns)
    B = columns[0].shape[0]
    i_size, h_size = params["w1"].shape
    o_size = params["w3"].shape[1]
    assert i_size == n_cols

    # Module's T.cat, done once in the wrapper -> single input operand.
    x = jnp.concatenate(columns, axis=1)  # (B, i_size) f32

    # Batch tiling on the sublane axis (multiple of 8); keep >=2 grid steps
    # when possible so both v7x TensorCores get a share of the parallel axis.
    bp8 = _round_up(B, 8)
    tb = min(block_b, max(8, _round_up(pl.cdiv(bp8, 2), 8)))
    bp = _round_up(bp8, tb)
    if bp != B:
        x = jnp.pad(x, ((0, bp - B), (0, 0)))

    # Pad w3/b3 columns to a lane multiple so the last matmul is MXU-friendly
    # (the kernel slices the real o_size columns back out before storing).
    op = _round_up(o_size, LANE)
    w3 = jnp.pad(params["w3"], ((0, 0), (0, op - o_size))).astype(jnp.bfloat16)
    b3 = jnp.pad(params["b3"], ((0, 0), (0, op - o_size)))

    # bf16 MXU operands (f32 accumulation inside the kernel).
    w1 = params["w1"].astype(jnp.bfloat16)
    w2 = params["w2"].astype(jnp.bfloat16)

    args = (x,
            w1, params["b1"], params["g1"], params["be1"],
            w2, params["b2"], params["g2"], params["be2"],
            w3, b3)

    def resident(a):
        # Block index never changes -> DMA'd once, VMEM-resident across grid.
        return pl.BlockSpec(a.shape, lambda i: (0, 0))

    in_specs = [pl.BlockSpec((tb, i_size), lambda i: (i, 0))] \
        + [resident(a) for a in args[1:]]
    out_spec = pl.BlockSpec((tb, o_size), lambda i: (i, 0))

    flops = 2 * bp * (i_size * h_size + h_size * h_size + h_size * op)
    transcendentals = bp * (2 + o_size)  # 2 rsqrt + o_size tanh per row
    bytes_accessed = (sum(int(a.size) * a.dtype.itemsize for a in args)
                      + bp * o_size * 4)

    out = pl.pallas_call(
        _make_mlp_kernel(o_size),
        out_shape=jax.ShapeDtypeStruct((bp, o_size), jnp.float32),
        grid=(bp // tb,),
        in_specs=in_specs,
        out_specs=out_spec,
        compiler_params=pltpu.CompilerParams(
            dimension_semantics=("parallel",)),
        cost_estimate=pl.CostEstimate(flops=flops,
                                      transcendentals=transcendentals,
                                      bytes_accessed=bytes_accessed),
    )(*args)

    return out[:B]


def mlp_reference(x, params):
    """Pure-JAX f32 reference of the module's forward (for correctness check)."""
    h = x @ params["w1"] + params["b1"]
    h = _layernorm_ref(h, params["g1"], params["be1"])
    h = jnp.maximum(h, 0.0)
    h = h @ params["w2"] + params["b2"]
    h = _layernorm_ref(h, params["g2"], params["be2"])
    h = jnp.maximum(h, 0.0)
    out = h @ params["w3"] + params["b3"]
    return jax.nn.sigmoid(out)


def init_params(key, i_size, h_size, o_size):
    """Deterministic parameter init mirroring the module's __init__:
       xavier_normal_(gain=calculate_gain('relu')) for Linear weights,
       PyTorch-default LayerNorm (gamma=1, beta=0), biases ~ small uniform.
       Weights stored as (in, out) so the kernel computes x @ W (== x @ W.T
       with PyTorch's (out, in) layout)."""
    gain = jnp.sqrt(2.0)  # calculate_gain('relu')

    def xavier_normal(k, fan_in, fan_out):
        std = gain * jnp.sqrt(2.0 / (fan_in + fan_out))
        return std * jax.random.normal(k, (fan_in, fan_out), dtype=jnp.float32)

    def bias(k, fan_in, fan_out):
        bound = 1.0 / jnp.sqrt(fan_in)
        return jax.random.uniform(k, (1, fan_out), dtype=jnp.float32,
                                  minval=-bound, maxval=bound)

    keys = jax.random.split(key, 6)
    return {
        "w1": xavier_normal(keys[0], i_size, h_size),
        "b1": bias(keys[1], i_size, h_size),
        "g1": jnp.ones((1, h_size), jnp.float32),
        "be1": jnp.zeros((1, h_size), jnp.float32),
        "w2": xavier_normal(keys[2], h_size, h_size),
        "b2": bias(keys[3], h_size, h_size),
        "g2": jnp.ones((1, h_size), jnp.float32),
        "be2": jnp.zeros((1, h_size), jnp.float32),
        "w3": xavier_normal(keys[4], h_size, o_size),
        "b3": bias(keys[5], h_size, o_size),
    }


if __name__ == "__main__":
    key = jax.random.PRNGKey(0)

    # Module config: fn has 3 features, u (= sn ∪ on) has 5 features, each size 1
    # -> i_size = 8.  h_size = 128 (default), h_layers = 2, o_size = 4.
    batch = 16
    fn_keys = ["f0", "f1", "f2"]
    u_keys = ["u0", "u1", "u2", "u3", "u4"]
    i_size = len(fn_keys) + len(u_keys)
    o_size = 4

    k_in, k_par = jax.random.split(key)
    feat_keys = jax.random.split(k_in, i_size)

    # Each dict value is a (batch, 1) tensor, as in the PyTorch forward.
    fn = {k: jax.random.normal(feat_keys[i], (batch, 1), dtype=jnp.float32)
          for i, k in enumerate(fn_keys)}
    u = {k: jax.random.normal(feat_keys[len(fn_keys) + i], (batch, 1), dtype=jnp.float32)
         for i, k in enumerate(u_keys)}

    params = init_params(k_par, i_size, H_SIZE, o_size)

    # Host-side glue for forward()'s dict handling: column order = fn then u.
    columns = [fn[k] for k in fn_keys] + [u[k] for k in u_keys]

    out = mlp_forward(columns, params)
    out = jax.block_until_ready(out)

    assert out.shape == (batch, o_size)
    assert bool(jnp.all((out >= 0.0) & (out <= 1.0)))  # sigmoid range sanity check

    # Cross-check against the pure-JAX f32 reference (bf16 MXU path -> loose tol).
    inp = jnp.concatenate(columns, axis=1)
    ref = mlp_reference(inp, params)
    max_err = float(jnp.max(jnp.abs(out - ref)))
    assert max_err < 2e-2, f"max abs error vs reference: {max_err}"

    print("KERNEL_OK")
</pallas_src>

<mosaic_0001>
module attributes {stable_mosaic.version = 11 : i64} {
  func.func @kernel(%arg0: i32, %arg1: memref<8x8xf32, #tpu.memory_space<vmem>>, %arg2: memref<8x128xbf16, #tpu.memory_space<vmem>>, %arg3: memref<1x128xf32, #tpu.memory_space<vmem>>, %arg4: memref<1x128xf32, #tpu.memory_space<vmem>>, %arg5: memref<1x128xf32, #tpu.memory_space<vmem>>, %arg6: memref<128x128xbf16, #tpu.memory_space<vmem>>, %arg7: memref<1x128xf32, #tpu.memory_space<vmem>>, %arg8: memref<1x128xf32, #tpu.memory_space<vmem>>, %arg9: memref<1x128xf32, #tpu.memory_space<vmem>>, %arg10: memref<128x128xbf16, #tpu.memory_space<vmem>>, %arg11: memref<1x128xf32, #tpu.memory_space<vmem>>, %arg12: memref<8x4xf32, #tpu.memory_space<vmem>>) attributes {dimension_semantics = [#tpu.dimension_semantics<parallel>], iteration_bounds = array<i64: 2>, scalar_prefetch = 0 : i64, scratch_operands = 0 : i64, tpu.core_type = #tpu.core_type<tc>, window_params = [{transform_indices = @transform_0, window_bounds = array<i64: 8, 8>}, {pipeline_mode = #tpu.pipeline_mode<synchronous>, transform_indices = @transform_1, window_bounds = array<i64: 8, 128>}, {pipeline_mode = #tpu.pipeline_mode<synchronous>, transform_indices = @transform_2, window_bounds = array<i64: 1, 128>}, {pipeline_mode = #tpu.pipeline_mode<synchronous>, transform_indices = @transform_3, window_bounds = array<i64: 1, 128>}, {pipeline_mode = #tpu.pipeline_mode<synchronous>, transform_indices = @transform_4, window_bounds = array<i64: 1, 128>}, {pipeline_mode = #tpu.pipeline_mode<synchronous>, transform_indices = @transform_5, window_bounds = array<i64: 128, 128>}, {pipeline_mode = #tpu.pipeline_mode<synchronous>, transform_indices = @transform_6, window_bounds = array<i64: 1, 128>}, {pipeline_mode = #tpu.pipeline_mode<synchronous>, transform_indices = @transform_7, window_bounds = array<i64: 1, 128>}, {pipeline_mode = #tpu.pipeline_mode<synchronous>, transform_indices = @transform_8, window_bounds = array<i64: 1, 128>}, {pipeline_mode = #tpu.pipeline_mode<synchronous>, transform_indices = @transform_9, window_bounds = array<i64: 128, 128>}, {pipeline_mode = #tpu.pipeline_mode<synchronous>, transform_indices = @transform_10, window_bounds = array<i64: 1, 128>}, {transform_indices = @transform_11, window_bounds = array<i64: 8, 4>}]} {
    %c0 = arith.constant 0 : index
    %c0_0 = arith.constant 0 : index
    %0 = vector.load %arg1[%c0, %c0_0] : memref<8x8xf32, #tpu.memory_space<vmem>>, vector<8x8xf32>
    %1 = arith.truncf %0 : vector<8x8xf32> to vector<8x8xbf16>
    %c0_1 = arith.constant 0 : index
    %c0_2 = arith.constant 0 : index
    %2 = vector.load %arg2[%c0_1, %c0_2] : memref<8x128xbf16, #tpu.memory_space<vmem>>, vector<8x128xbf16>
    %cst = arith.constant dense<0.000000e+00> : vector<8x128xf32>
    %3 = tpu.matmul %1, %2, %cst {dimension_numbers = #tpu.dot_dimension_numbers<[1], [0], [0], [1], [0, 0, 1, 1], [], []>} : vector<8x8xbf16>, vector<8x128xbf16>, vector<8x128xf32> -> vector<8x128xf32>
    %c0_3 = arith.constant 0 : index
    %c0_4 = arith.constant 0 : index
    %4 = vector.load %arg3[%c0_3, %c0_4] : memref<1x128xf32, #tpu.memory_space<vmem>>, vector<1x128xf32>
    %5 = vector.broadcast %4 : vector<1x128xf32> to vector<8x128xf32>
    %6 = arith.addf %3, %5 : vector<8x128xf32>
    %c0_5 = arith.constant 0 : index
    %c0_6 = arith.constant 0 : index
    %7 = vector.load %arg4[%c0_5, %c0_6] : memref<1x128xf32, #tpu.memory_space<vmem>>, vector<1x128xf32>
    %c0_7 = arith.constant 0 : index
    %c0_8 = arith.constant 0 : index
    %8 = vector.load %arg5[%c0_7, %c0_8] : memref<1x128xf32, #tpu.memory_space<vmem>>, vector<1x128xf32>
    %cst_9 = arith.constant dense<0.000000e+00> : vector<8xf32>
    %9 = vector.multi_reduction <add>, %6, %cst_9 [1] : vector<8x128xf32> to vector<8xf32>
    %10 = vector.shape_cast %9 : vector<8xf32> to vector<8x1xf32>
    %cst_10 = arith.constant 1.280000e+02 : f32
    %11 = vector.broadcast %cst_10 : f32 to vector<8x1xf32>
    %12 = arith.divf %10, %11 : vector<8x1xf32>
    %13 = arith.mulf %6, %6 : vector<8x128xf32>
    %cst_11 = arith.constant dense<0.000000e+00> : vector<8xf32>
    %14 = vector.multi_reduction <add>, %13, %cst_11 [1] : vector<8x128xf32> to vector<8xf32>
    %15 = vector.shape_cast %14 : vector<8xf32> to vector<8x1xf32>
    %cst_12 = arith.constant 1.280000e+02 : f32
    %16 = vector.broadcast %cst_12 : f32 to vector<8x1xf32>
    %17 = arith.divf %15, %16 : vector<8x1xf32>
    %18 = arith.mulf %12, %12 : vector<8x1xf32>
    %19 = arith.subf %17, %18 : vector<8x1xf32>
    %cst_13 = arith.constant 9.99999974E-6 : f32
    %20 = vector.broadcast %cst_13 : f32 to vector<8x1xf32>
    %21 = arith.addf %19, %20 : vector<8x1xf32>
    %22 = math.rsqrt %21 : vector<8x1xf32>
    %23 = vector.broadcast %12 : vector<8x1xf32> to vector<8x128xf32>
    %24 = arith.subf %6, %23 : vector<8x128xf32>
    %25 = vector.broadcast %22 : vector<8x1xf32> to vector<8x128xf32>
    %26 = arith.mulf %24, %25 : vector<8x128xf32>
    %27 = vector.broadcast %7 : vector<1x128xf32> to vector<8x128xf32>
    %28 = arith.mulf %26, %27 : vector<8x128xf32>
    %29 = vector.broadcast %8 : vector<1x128xf32> to vector<8x128xf32>
    %30 = arith.addf %28, %29 : vector<8x128xf32>
    %cst_14 = arith.constant 0.000000e+00 : f32
    %31 = vector.broadcast %cst_14 : f32 to vector<8x128xf32>
    %32 = arith.maximumf %30, %31 : vector<8x128xf32>
    %33 = arith.truncf %32 : vector<8x128xf32> to vector<8x128xbf16>
    %c0_15 = arith.constant 0 : index
    %c0_16 = arith.constant 0 : index
    %34 = vector.load %arg6[%c0_15, %c0_16] : memref<128x128xbf16, #tpu.memory_space<vmem>>, vector<128x128xbf16>
    %cst_17 = arith.constant dense<0.000000e+00> : vector<8x128xf32>
    %35 = tpu.matmul %33, %34, %cst_17 {dimension_numbers = #tpu.dot_dimension_numbers<[1], [0], [0], [1], [0, 0, 1, 1], [], []>} : vector<8x128xbf16>, vector<128x128xbf16>, vector<8x128xf32> -> vector<8x128xf32>
    %c0_18 = arith.constant 0 : index
    %c0_19 = arith.constant 0 : index
    %36 = vector.load %arg7[%c0_18, %c0_19] : memref<1x128xf32, #tpu.memory_space<vmem>>, vector<1x128xf32>
    %37 = vector.broadcast %36 : vector<1x128xf32> to vector<8x128xf32>
    %38 = arith.addf %35, %37 : vector<8x128xf32>
    %c0_20 = arith.constant 0 : index
    %c0_21 = arith.constant 0 : index
    %39 = vector.load %arg8[%c0_20, %c0_21] : memref<1x128xf32, #tpu.memory_space<vmem>>, vector<1x128xf32>
    %c0_22 = arith.constant 0 : index
    %c0_23 = arith.constant 0 : index
    %40 = vector.load %arg9[%c0_22, %c0_23] : memref<1x128xf32, #tpu.memory_space<vmem>>, vector<1x128xf32>
    %cst_24 = arith.constant dense<0.000000e+00> : vector<8xf32>
    %41 = vector.multi_reduction <add>, %38, %cst_24 [1] : vector<8x128xf32> to vector<8xf32>
    %42 = vector.shape_cast %41 : vector<8xf32> to vector<8x1xf32>
    %cst_25 = arith.constant 1.280000e+02 : f32
    %43 = vector.broadcast %cst_25 : f32 to vector<8x1xf32>
    %44 = arith.divf %42, %43 : vector<8x1xf32>
    %45 = arith.mulf %38, %38 : vector<8x128xf32>
    %cst_26 = arith.constant dense<0.000000e+00> : vector<8xf32>
    %46 = vector.multi_reduction <add>, %45, %cst_26 [1] : vector<8x128xf32> to vector<8xf32>
    %47 = vector.shape_cast %46 : vector<8xf32> to vector<8x1xf32>
    %cst_27 = arith.constant 1.280000e+02 : f32
    %48 = vector.broadcast %cst_27 : f32 to vector<8x1xf32>
    %49 = arith.divf %47, %48 : vector<8x1xf32>
    %50 = arith.mulf %44, %44 : vector<8x1xf32>
    %51 = arith.subf %49, %50 : vector<8x1xf32>
    %cst_28 = arith.constant 9.99999974E-6 : f32
    %52 = vector.broadcast %cst_28 : f32 to vector<8x1xf32>
    %53 = arith.addf %51, %52 : vector<8x1xf32>
    %54 = math.rsqrt %53 : vector<8x1xf32>
    %55 = vector.broadcast %44 : vector<8x1xf32> to vector<8x128xf32>
    %56 = arith.subf %38, %55 : vector<8x128xf32>
    %57 = vector.broadcast %54 : vector<8x1xf32> to vector<8x128xf32>
    %58 = arith.mulf %56, %57 : vector<8x128xf32>
    %59 = vector.broadcast %39 : vector<1x128xf32> to vector<8x128xf32>
    %60 = arith.mulf %58, %59 : vector<8x128xf32>
    %61 = vector.broadcast %40 : vector<1x128xf32> to vector<8x128xf32>
    %62 = arith.addf %60, %61 : vector<8x128xf32>
    %cst_29 = arith.constant 0.000000e+00 : f32
    %63 = vector.broadcast %cst_29 : f32 to vector<8x128xf32>
    %64 = arith.maximumf %62, %63 : vector<8x128xf32>
    %65 = arith.truncf %64 : vector<8x128xf32> to vector<8x128xbf16>
    %c0_30 = arith.constant 0 : index
    %c0_31 = arith.constant 0 : index
    %66 = vector.load %arg10[%c0_30, %c0_31] : memref<128x128xbf16, #tpu.memory_space<vmem>>, vector<128x128xbf16>
    %cst_32 = arith.constant dense<0.000000e+00> : vector<8x128xf32>
    %67 = tpu.matmul %65, %66, %cst_32 {dimension_numbers = #tpu.dot_dimension_numbers<[1], [0], [0], [1], [0, 0, 1, 1], [], []>} : vector<8x128xbf16>, vector<128x128xbf16>, vector<8x128xf32> -> vector<8x128xf32>
    %c0_33 = arith.constant 0 : index
    %c0_34 = arith.constant 0 : index
    %68 = vector.load %arg11[%c0_33, %c0_34] : memref<1x128xf32, #tpu.memory_space<vmem>>, vector<1x128xf32>
    %69 = vector.broadcast %68 : vector<1x128xf32> to vector<8x128xf32>
    %70 = arith.addf %67, %69 : vector<8x128xf32>
    %71 = vector.extract_strided_slice %70 {offsets = [0, 0], sizes = [8, 4], strides = [1, 1]} : vector<8x128xf32> to vector<8x4xf32>
    %cst_35 = arith.constant 5.000000e-01 : f32
    %72 = vector.broadcast %cst_35 : f32 to vector<8x4xf32>
    %73 = arith.mulf %72, %71 : vector<8x4xf32>
    %74 = math.tanh %73 : vector<8x4xf32>
    %cst_36 = arith.constant 5.000000e-01 : f32
    %75 = vector.broadcast %cst_36 : f32 to vector<8x4xf32>
    %76 = arith.mulf %75, %74 : vector<8x4xf32>
    %cst_37 = arith.constant 5.000000e-01 : f32
    %77 = vector.broadcast %cst_37 : f32 to vector<8x4xf32>
    %78 = arith.addf %76, %77 : vector<8x4xf32>
    %c0_38 = arith.constant 0 : index
    %c0_39 = arith.constant 0 : index
    %79 = vector.load %arg12[%c0_38, %c0_39] : memref<8x4xf32, #tpu.memory_space<vmem>>, vector<8x4xf32>
    tpu.vector_store %arg12[%c0_38, %c0_39], %78 {strides = array<i32>} : memref<8x4xf32, #tpu.memory_space<vmem>>, vector<8x4xf32>,
    return
  }
  func.func @transform_0(%arg0: i32) -> (i32, i32) {
    %c0_i32 = arith.constant 0 : i32
    %c0_i32_0 = arith.constant 0 : i32
    return %arg0, %c0_i32 : i32, i32
  }
  func.func @transform_1(%arg0: i32) -> (i32, i32) {
    %c0_i32 = arith.constant 0 : i32
    %c0_i32_0 = arith.constant 0 : i32
    %c0_i32_1 = arith.constant 0 : i32
    return %c0_i32, %c0_i32_0 : i32, i32
  }
  func.func @transform_2(%arg0: i32) -> (i32, i32) {
    %c0_i32 = arith.constant 0 : i32
    %c0_i32_0 = arith.constant 0 : i32
    %c0_i32_1 = arith.constant 0 : i32
    return %c0_i32, %c0_i32_0 : i32, i32
  }
  func.func @transform_3(%arg0: i32) -> (i32, i32) {
    %c0_i32 = arith.constant 0 : i32
    %c0_i32_0 = arith.constant 0 : i32
    %c0_i32_1 = arith.constant 0 : i32
    return %c0_i32, %c0_i32_0 : i32, i32
  }
  func.func @transform_4(%arg0: i32) -> (i32, i32) {
    %c0_i32 = arith.constant 0 : i32
    %c0_i32_0 = arith.constant 0 : i32
    %c0_i32_1 = arith.constant 0 : i32
    return %c0_i32, %c0_i32_0 : i32, i32
  }
  func.func @transform_5(%arg0: i32) -> (i32, i32) {
    %c0_i32 = arith.constant 0 : i32
    %c0_i32_0 = arith.constant 0 : i32
    %c0_i32_1 = arith.constant 0 : i32
    return %c0_i32, %c0_i32_0 : i32, i32
  }
  func.func @transform_6(%arg0: i32) -> (i32, i32) {
    %c0_i32 = arith.constant 0 : i32
    %c0_i32_0 = arith.constant 0 : i32
    %c0_i32_1 = arith.constant 0 : i32
    return %c0_i32, %c0_i32_0 : i32, i32
  }
  func.func @transform_7(%arg0: i32) -> (i32, i32) {
    %c0_i32 = arith.constant 0 : i32
    %c0_i32_0 = arith.constant 0 : i32
    %c0_i32_1 = arith.constant 0 : i32
    return %c0_i32, %c0_i32_0 : i32, i32
  }
  func.func @transform_8(%arg0: i32) -> (i32, i32) {
    %c0_i32 = arith.constant 0 : i32
    %c0_i32_0 = arith.constant 0 : i32
    %c0_i32_1 = arith.constant 0 : i32
    return %c0_i32, %c0_i32_0 : i32, i32
  }
  func.func @transform_9(%arg0: i32) -> (i32, i32) {
    %c0_i32 = arith.constant 0 : i32
    %c0_i32_0 = arith.constant 0 : i32
    %c0_i32_1 = arith.constant 0 : i32
    return %c0_i32, %c0_i32_0 : i32, i32
  }
  func.func @transform_10(%arg0: i32) -> (i32, i32) {
    %c0_i32 = arith.constant 0 : i32
    %c0_i32_0 = arith.constant 0 : i32
    %c0_i32_1 = arith.constant 0 : i32
    return %c0_i32, %c0_i32_0 : i32, i32
  }
  func.func @transform_11(%arg0: i32) -> (i32, i32) {
    %c0_i32 = arith.constant 0 : i32
    %c0_i32_0 = arith.constant 0 : i32
    return %arg0, %c0_i32 : i32, i32
  }
}

</mosaic_0001>

<llo_original>
// kernel: tpu_custom_call.1
$region0: #{tpu_custom_call.1}
  #allocation0 [shape = 'u32[]', space=smem, size = 0x4, offset = 0x4, fixed_abs, tag = 'smem constant byte address 0x4 - core index']
  #allocation1 [shape = 'u32[144,128]{1,0:T(1,128)}', space=vmem, size = 0x12000, scoped, tag = 'internal scratch']
  %s0 = inlined_call_operand.vmem [shape: f32[16,8], index: 0, kind: input, shape index: {}]
  %s1 = inlined_call_operand.vmem [shape: bf16[8,128], index: 1, kind: input, shape index: {}]
  %s2 = inlined_call_operand.vmem [shape: f32[1,128], index: 2, kind: input, shape index: {}]
  %s3 = inlined_call_operand.vmem [shape: f32[1,128], index: 3, kind: input, shape index: {}]
  %s4 = inlined_call_operand.vmem [shape: f32[1,128], index: 4, kind: input, shape index: {}]
  %s5 = inlined_call_operand.hbm [shape: bf16[128,128], index: 5, kind: input, shape index: {}]
  %s6 = inlined_call_operand.vmem [shape: f32[1,128], index: 6, kind: input, shape index: {}]
  %s7 = inlined_call_operand.vmem [shape: f32[1,128], index: 7, kind: input, shape index: {}]
  %s8 = inlined_call_operand.vmem [shape: f32[1,128], index: 8, kind: input, shape index: {}]
  %s9 = inlined_call_operand.hbm [shape: bf16[128,128], index: 9, kind: input, shape index: {}]
  %s10 = inlined_call_operand.vmem [shape: f32[1,128], index: 10, kind: input, shape index: {}]
  %s11 = inlined_call_operand.vmem [shape: f32[16,4], index: 11, kind: output, shape index: {}]
  %s12 = sld [smem:[#allocation0]]
  $region85: #{tpu_custom_call.1} parent=0
    _
  %s14 = ssub.s32 1, %s12
  %s15 = scalar_select 0, %s14, %s12
  $region1: #{tpu_custom_call.1} parent=0
    #allocation2 [shape = 'u8[32768]{0}', space=vmem, size = 0x8000, scoped, tag = 'input window, operand 5, single buffered']
    #allocation3 [shape = 's32[2]{0}', space=sflag, size = 0x8, scoped, tag = 'scoped memory for tpu_custom_call.1']
    #allocation4 [shape = 'u8[32768]{0}', space=vmem, size = 0x8000, scoped, tag = 'input window, operand 9, single buffered']
    #allocation5 [shape = 's32[1]{0}', space=sflag, size = 0x4, scoped, tag = 'scoped memory for tpu_custom_call.1']
    %16 = vsyncpa [#allocation3], 0
    %17 = vsyncpa [#allocation5], 0
    loop: start=0, step=1, limit=4
    $region2: #{tpu_custom_call.1} parent=1 // loop_pre_header
      _
    $region3: #{tpu_custom_call.1} parent=1 // loop_header
      %s19 = sphi 0, %s23
      %p20 = scmp.ge.s32.totalorder %s19, 4
      %s29 = sphi 0, %s31
      %s32 = sphi 0, %s29
      %s33 = sphi 0, %s32
      %s49 = sphi 0, %s33
      %s53 = sphi 0, %s53
      %s55 = sphi 0, %s53
      %s56 = sphi 0, %s55
      %s70 = sphi 0, %s56
      %s74 = sphi 0, %s74
      %s76 = sphi 0, %s74
      %s77 = sphi 0, %s76
      %s91 = sphi 0, %s77
      %s95 = sphi 0, %s95
      %s97 = sphi 0, %s95
      %s98 = sphi 0, %s97
      %s112 = sphi 0, %s98
      %s116 = sphi 0, %s116
      %s118 = sphi 0, %s116
      %s119 = sphi 0, %s118
      %s133 = sphi 0, %s119
      %s137 = sphi 0, %s137
      %s139 = sphi 0, %s137
      %s140 = sphi 0, %s139
      %s154 = sphi 0, %s140
      %s158 = sphi 0, %s158
      %s160 = sphi 0, %s158
      %s161 = sphi 0, %s160
      %s175 = sphi 0, %s161
      %s179 = sphi 0, %s179
      %s181 = sphi 0, %s179
      %s182 = sphi 0, %s181
      %s196 = sphi 0, %s182
      %s200 = sphi 0, %s200
      %s202 = sphi 0, %s200
      %s203 = sphi 0, %s202
      %s217 = sphi 0, %s203
      %s221 = sphi 0, %s221
      %s223 = sphi 0, %s221
      %s224 = sphi 0, %s223
      %s238 = sphi 0, %s224
      %s242 = sphi 0, %s242
      %s244 = sphi 0, %s242
      %s245 = sphi 0, %s244
      %s259 = sphi 0, %s245
      %s265 = sphi 0, %s267
      %s268 = sphi 0, %s265
      %s269 = sphi 0, %s268
      %s285 = sphi 0, %s269
    $region4: #{tpu_custom_call.1} parent=1 // loop_header_branch
      %22 = sbr.rel (%p20) target = $region8
    $region5: #{tpu_custom_call.1} parent=1 // loop_body
      %s24 = ssub.s32 %s19, 1
      %s25 = ssub.s32 %s19, 2
      %s26 = sadd.s32 %s19, 1
      %s27 = ssub.s32 %s19, %s26
      %p28 = scmp.eq.s32.totalorder %s27, 0
      %s30 = sadd.s32 %s29, 1
      %s31 = scalar_select %p28, %s29, %s30
      %p34 = pneg %p28
      %p35 = scmp.eq.s32.totalorder %s19, 1
      %p36 = por %p34, %p35
      %p37 = scmp.ne.s32.totalorder %s29, %s32
      %p38 = scmp.eq.s32.totalorder %s19, 0
      %p39 = por %p37, %p38
      %p40 = scmp.ne.s32.totalorder %s29, %s32
      %p41 = scmp.eq.s32.totalorder %s24, 1
      %p42 = por %p40, %p41
      %p43 = scmp.ne.s32.totalorder %s32, %s33
      %p44 = scmp.eq.s32.totalorder %s24, 0
      %p45 = por %p43, %p44
      %p46 = scmp.ne.s32.totalorder %s32, %s33
      %p47 = scmp.eq.s32.totalorder %s25, 1
      %p48 = por %p46, %p47
      %p50 = scmp.ne.s32.totalorder %s33, %s49
      %p51 = scmp.eq.s32.totalorder %s25, 0
      %p52 = por %p50, %p51
      %s54 = sadd.s32 %s53, 1
      %p57 = scmp.eq.s32.totalorder %s19, 1
      %p58 = scmp.ne.s32.totalorder %s53, %s55
      %p59 = scmp.eq.s32.totalorder %s19, 0
      %p60 = por %p58, %p59
      %p61 = scmp.ne.s32.totalorder %s53, %s55
      %p62 = scmp.eq.s32.totalorder %s24, 1
      %p63 = por %p61, %p62
      %p64 = scmp.ne.s32.totalorder %s55, %s56
      %p65 = scmp.eq.s32.totalorder %s24, 0
      %p66 = por %p64, %p65
      %p67 = scmp.ne.s32.totalorder %s55, %s56
      %p68 = scmp.eq.s32.totalorder %s25, 1
      %p69 = por %p67, %p68
      %p71 = scmp.ne.s32.totalorder %s56, %s70
      %p72 = scmp.eq.s32.totalorder %s25, 0
      %p73 = por %p71, %p72
      %s75 = sadd.s32 %s74, 1
      %p78 = scmp.eq.s32.totalorder %s19, 1
      %p79 = scmp.ne.s32.totalorder %s74, %s76
      %p80 = scmp.eq.s32.totalorder %s19, 0
      %p81 = por %p79, %p80
      %p82 = scmp.ne.s32.totalorder %s74, %s76
      %p83 = scmp.eq.s32.totalorder %s24, 1
      %p84 = por %p82, %p83
      %p85 = scmp.ne.s32.totalorder %s76, %s77
      %p86 = scmp.eq.s32.totalorder %s24, 0
      %p87 = por %p85, %p86
      %p88 = scmp.ne.s32.totalorder %s76, %s77
      %p89 = scmp.eq.s32.totalorder %s25, 1
      %p90 = por %p88, %p89
      %p92 = scmp.ne.s32.totalorder %s77, %s91
      %p93 = scmp.eq.s32.totalorder %s25, 0
      %p94 = por %p92, %p93
      %s96 = sadd.s32 %s95, 1
      %p99 = scmp.eq.s32.totalorder %s19, 1
      %p100 = scmp.ne.s32.totalorder %s95, %s97
      %p101 = scmp.eq.s32.totalorder %s19, 0
      %p102 = por %p100, %p101
      %p103 = scmp.ne.s32.totalorder %s95, %s97
      %p104 = scmp.eq.s32.totalorder %s24, 1
      %p105 = por %p103, %p104
      %p106 = scmp.ne.s32.totalorder %s97, %s98
      %p107 = scmp.eq.s32.totalorder %s24, 0
      %p108 = por %p106, %p107
      %p109 = scmp.ne.s32.totalorder %s97, %s98
      %p110 = scmp.eq.s32.totalorder %s25, 1
      %p111 = por %p109, %p110
      %p113 = scmp.ne.s32.totalorder %s98, %s112
      %p114 = scmp.eq.s32.totalorder %s25, 0
      %p115 = por %p113, %p114
      %s117 = sadd.s32 %s116, 1
      %p120 = scmp.eq.s32.totalorder %s19, 1
      %p121 = scmp.ne.s32.totalorder %s116, %s118
      %p122 = scmp.eq.s32.totalorder %s19, 0
      %p123 = por %p121, %p122
      %p124 = scmp.ne.s32.totalorder %s116, %s118
      %p125 = scmp.eq.s32.totalorder %s24, 1
      %p126 = por %p124, %p125
      %p127 = scmp.ne.s32.totalorder %s118, %s119
      %p128 = scmp.eq.s32.totalorder %s24, 0
      %p129 = por %p127, %p128
      %p130 = scmp.ne.s32.totalorder %s118, %s119
      %p131 = scmp.eq.s32.totalorder %s25, 1
      %p132 = por %p130, %p131
      %p134 = scmp.ne.s32.totalorder %s119, %s133
      %p135 = scmp.eq.s32.totalorder %s25, 0
      %p136 = por %p134, %p135
      %s138 = sadd.s32 %s137, 1
      %p141 = scmp.eq.s32.totalorder %s19, 1
      %p142 = scmp.ne.s32.totalorder %s137, %s139
      %p143 = scmp.eq.s32.totalorder %s19, 0
      %p144 = por %p142, %p143
      %p145 = scmp.ne.s32.totalorder %s137, %s139
      %p146 = scmp.eq.s32.totalorder %s24, 1
      %p147 = por %p145, %p146
      %p148 = scmp.ne.s32.totalorder %s139, %s140
      %p149 = scmp.eq.s32.totalorder %s24, 0
      %p150 = por %p148, %p149
      %p151 = scmp.ne.s32.totalorder %s139, %s140
      %p152 = scmp.eq.s32.totalorder %s25, 1
      %p153 = por %p151, %p152
      %p155 = scmp.ne.s32.totalorder %s140, %s154
      %p156 = scmp.eq.s32.totalorder %s25, 0
      %p157 = por %p155, %p156
      %s159 = sadd.s32 %s158, 1
      %p162 = scmp.eq.s32.totalorder %s19, 1
      %p163 = scmp.ne.s32.totalorder %s158, %s160
      %p164 = scmp.eq.s32.totalorder %s19, 0
      %p165 = por %p163, %p164
      %p166 = scmp.ne.s32.totalorder %s158, %s160
      %p167 = scmp.eq.s32.totalorder %s24, 1
      %p168 = por %p166, %p167
      %p169 = scmp.ne.s32.totalorder %s160, %s161
      %p170 = scmp.eq.s32.totalorder %s24, 0
      %p171 = por %p169, %p170
      %p172 = scmp.ne.s32.totalorder %s160, %s161
      %p173 = scmp.eq.s32.totalorder %s25, 1
      %p174 = por %p172, %p173
      %p176 = scmp.ne.s32.totalorder %s161, %s175
      %p177 = scmp.eq.s32.totalorder %s25, 0
      %p178 = por %p176, %p177
      %s180 = sadd.s32 %s179, 1
      %p183 = scmp.eq.s32.totalorder %s19, 1
      %p184 = scmp.ne.s32.totalorder %s179, %s181
      %p185 = scmp.eq.s32.totalorder %s19, 0
      %p186 = por %p184, %p185
      %p187 = scmp.ne.s32.totalorder %s179, %s181
      %p188 = scmp.eq.s32.totalorder %s24, 1
      %p189 = por %p187, %p188
      %p190 = scmp.ne.s32.totalorder %s181, %s182
      %p191 = scmp.eq.s32.totalorder %s24, 0
      %p192 = por %p190, %p191
      %p193 = scmp.ne.s32.totalorder %s181, %s182
      %p194 = scmp.eq.s32.totalorder %s25, 1
      %p195 = por %p193, %p194
      %p197 = scmp.ne.s32.totalorder %s182, %s196
      %p198 = scmp.eq.s32.totalorder %s25, 0
      %p199 = por %p197, %p198
      %s201 = sadd.s32 %s200, 1
      %p204 = scmp.eq.s32.totalorder %s19, 1
      %p205 = scmp.ne.s32.totalorder %s200, %s202
      %p206 = scmp.eq.s32.totalorder %s19, 0
      %p207 = por %p205, %p206
      %p208 = scmp.ne.s32.totalorder %s200, %s202
      %p209 = scmp.eq.s32.totalorder %s24, 1
      %p210 = por %p208, %p209
      %p211 = scmp.ne.s32.totalorder %s202, %s203
      %p212 = scmp.eq.s32.totalorder %s24, 0
      %p213 = por %p211, %p212
      %p214 = scmp.ne.s32.totalorder %s202, %s203
      %p215 = scmp.eq.s32.totalorder %s25, 1
      %p216 = por %p214, %p215
      %p218 = scmp.ne.s32.totalorder %s203, %s217
      %p219 = scmp.eq.s32.totalorder %s25, 0
      %p220 = por %p218, %p219
      %s222 = sadd.s32 %s221, 1
      %p225 = scmp.eq.s32.totalorder %s19, 1
      %p226 = scmp.ne.s32.totalorder %s221, %s223
      %p227 = scmp.eq.s32.totalorder %s19, 0
      %p228 = por %p226, %p227
      %p229 = scmp.ne.s32.totalorder %s221, %s223
      %p230 = scmp.eq.s32.totalorder %s24, 1
      %p231 = por %p229, %p230
      %p232 = scmp.ne.s32.totalorder %s223, %s224
      %p233 = scmp.eq.s32.totalorder %s24, 0
      %p234 = por %p232, %p233
      %p235 = scmp.ne.s32.totalorder %s223, %s224
      %p236 = scmp.eq.s32.totalorder %s25, 1
      %p237 = por %p235, %p236
      %p239 = scmp.ne.s32.totalorder %s224, %s238
      %p240 = scmp.eq.s32.totalorder %s25, 0
      %p241 = por %p239, %p240
      %s243 = sadd.s32 %s242, 1
      %p246 = scmp.eq.s32.totalorder %s19, 1
      %p247 = scmp.ne.s32.totalorder %s242, %s244
      %p248 = scmp.eq.s32.totalorder %s19, 0
      %p249 = por %p247, %p248
      %p250 = scmp.ne.s32.totalorder %s242, %s244
      %p251 = scmp.eq.s32.totalorder %s24, 1
      %p252 = por %p250, %p251
      %p253 = scmp.ne.s32.totalorder %s244, %s245
      %p254 = scmp.eq.s32.totalorder %s24, 0
      %p255 = por %p253, %p254
      %p256 = scmp.ne.s32.totalorder %s244, %s245
      %p257 = scmp.eq.s32.totalorder %s25, 1
      %p258 = por %p256, %p257
      %p260 = scmp.ne.s32.totalorder %s245, %s259
      %p261 = scmp.eq.s32.totalorder %s25, 0
      %p262 = por %p260, %p261
      %s263 = ssub.s32 %s19, %s26
      %p264 = scmp.eq.s32.totalorder %s263, 0
      %s266 = sadd.s32 %s265, 1
      %s267 = scalar_select %p264, %s265, %s266
      %p270 = pneg %p264
      %p271 = scmp.eq.s32.totalorder %s19, 1
      %p272 = por %p270, %p271
      %p273 = scmp.ne.s32.totalorder %s265, %s268
      %p274 = scmp.eq.s32.totalorder %s19, 0
      %p275 = por %p273, %p274
      %p276 = scmp.ne.s32.totalorder %s265, %s268
      %p277 = scmp.eq.s32.totalorder %s24, 1
      %p278 = por %p276, %p277
      %p279 = scmp.ne.s32.totalorder %s268, %s269
      %p280 = scmp.eq.s32.totalorder %s24, 0
      %p281 = por %p279, %p280
      %p282 = scmp.ne.s32.totalorder %s268, %s269
      %p283 = scmp.eq.s32.totalorder %s25, 1
      %p284 = por %p282, %p283
      %p286 = scmp.ne.s32.totalorder %s269, %s285
      %p287 = scmp.eq.s32.totalorder %s25, 0
      %p288 = por %p286, %p287
      %p289 = scmp.le.s32.totalorder 1, %s19
      %p290 = scmp.lt.s32.totalorder %s19, 3
      %p291 = pnand %p289, %p290
      %p292 = pneg %p291
      // Predicated region
      $region9: #{tpu_custom_call.1} parent=5 // pred_check
        _
      $region10: #{tpu_custom_call.1} parent=5 // pred_check_branch
        %294 = sbr.rel (%p291) target = $region12
      $region11: #{tpu_custom_call.1} parent=5 // pred_region
        %s295 = ssub.s32 %s19, 1
        // Predicated region
        $region13: #{tpu_custom_call.1} parent=11 // pred_check
          %p296 = pneg %p66
        $region14: #{tpu_custom_call.1} parent=11 // pred_check_branch
          %298 = sbr.rel (%p296) target = $region16
        $region15: #{tpu_custom_call.1} parent=11 // pred_region
          _
        $region16: #{tpu_custom_call.1} parent=11 // pred_fallthru
          _
        // Predicated region
        $region17: #{tpu_custom_call.1} parent=11 // pred_check
          %p299 = pneg %p87
        $region18: #{tpu_custom_call.1} parent=11 // pred_check_branch
          %301 = sbr.rel (%p299) target = $region20
        $region19: #{tpu_custom_call.1} parent=11 // pred_region
          _
        $region20: #{tpu_custom_call.1} parent=11 // pred_fallthru
          _
        // Predicated region
        $region21: #{tpu_custom_call.1} parent=11 // pred_check
          %p302 = pneg %p108
        $region22: #{tpu_custom_call.1} parent=11 // pred_check_branch
          %304 = sbr.rel (%p302) target = $region24
        $region23: #{tpu_custom_call.1} parent=11 // pred_region
          _
        $region24: #{tpu_custom_call.1} parent=11 // pred_fallthru
          _
        // Predicated region
        $region25: #{tpu_custom_call.1} parent=11 // pred_check
          %p305 = pneg %p129
        $region26: #{tpu_custom_call.1} parent=11 // pred_check_branch
          %307 = sbr.rel (%p305) target = $region28
        $region27: #{tpu_custom_call.1} parent=11 // pred_region
          _
        $region28: #{tpu_custom_call.1} parent=11 // pred_fallthru
          _
        // Predicated region
        $region29: #{tpu_custom_call.1} parent=11 // pred_check
          %p308 = pneg %p150
        $region30: #{tpu_custom_call.1} parent=11 // pred_check_branch
          %310 = sbr.rel (%p308) target = $region32
        $region31: #{tpu_custom_call.1} parent=11 // pred_region
          %s312 = ssub.s32 1024, 1024
          %313 = vsyncadd [#allocation3], %s312
          %s314 = sshll.u32 [#allocation2], 4
          %s315 = int_to_ptr.vmem [resolvable:$true] %s314
          %320 = dma.hbm_to_vmem [thread:$0]  %s5, 1024, %s315, [#allocation3], 64, 64, 4
        $region32: #{tpu_custom_call.1} parent=11 // pred_fallthru
          _
        // Predicated region
        $region33: #{tpu_custom_call.1} parent=11 // pred_check
          %p321 = pneg %p171
        $region34: #{tpu_custom_call.1} parent=11 // pred_check_branch
          %323 = sbr.rel (%p321) target = $region36
        $region35: #{tpu_custom_call.1} parent=11 // pred_region
          _
        $region36: #{tpu_custom_call.1} parent=11 // pred_fallthru
          _
        // Predicated region
        $region37: #{tpu_custom_call.1} parent=11 // pred_check
          %p324 = pneg %p192
        $region38: #{tpu_custom_call.1} parent=11 // pred_check_branch
          %326 = sbr.rel (%p324) target = $region40
        $region39: #{tpu_custom_call.1} parent=11 // pred_region
          _
        $region40: #{tpu_custom_call.1} parent=11 // pred_fallthru
          _
        // Predicated region
        $region41: #{tpu_custom_call.1} parent=11 // pred_check
          %p327 = pneg %p213
        $region42: #{tpu_custom_call.1} parent=11 // pred_check_branch
          %329 = sbr.rel (%p327) target = $region44
        $region43: #{tpu_custom_call.1} parent=11 // pred_region
          _
        $region44: #{tpu_custom_call.1} parent=11 // pred_fallthru
          _
        // Predicated region
        $region45: #{tpu_custom_call.1} parent=11 // pred_check
          %p330 = pneg %p234
        $region46: #{tpu_custom_call.1} parent=11 // pred_check_branch
          %332 = sbr.rel (%p330) target = $region48
        $region47: #{tpu_custom_call.1} parent=11 // pred_region
          %s334 = ssub.s32 1024, 1024
          %335 = vsyncadd [#allocation5], %s334
          %s336 = sshll.u32 [#allocation4], 4
          %s337 = int_to_ptr.vmem [resolvable:$true] %s336
          %342 = dma.hbm_to_vmem [thread:$0]  %s9, 1024, %s337, [#allocation5], 64, 64, 4
        $region48: #{tpu_custom_call.1} parent=11 // pred_fallthru
          _
        // Predicated region
        $region49: #{tpu_custom_call.1} parent=11 // pred_check
          %p343 = pneg %p255
        $region50: #{tpu_custom_call.1} parent=11 // pred_check_branch
          %345 = sbr.rel (%p343) target = $region52
        $region51: #{tpu_custom_call.1} parent=11 // pred_region
          _
        $region52: #{tpu_custom_call.1} parent=11 // pred_fallthru
          _
      $region12: #{tpu_custom_call.1} parent=5 // pred_fallthru
        _
      %p346 = scmp.lt.s32.totalorder %s19, 2
      // Predicated region
      $region53: #{tpu_custom_call.1} parent=5 // pred_check
        %p347 = pneg %p346
      $region54: #{tpu_custom_call.1} parent=5 // pred_check_branch
        %349 = sbr.rel (%p347) target = $region56
      $region55: #{tpu_custom_call.1} parent=5 // pred_region
        // Predicated region
        $region57: #{tpu_custom_call.1} parent=55 // pred_check
          %p350 = pneg %p39
        $region58: #{tpu_custom_call.1} parent=55 // pred_check_branch
          %352 = sbr.rel (%p350) target = $region60
        $region59: #{tpu_custom_call.1} parent=55 // pred_region
          %p353 = scmp.lt.s32.totalorder %s19, 1
          %s354 = scalar_select %p353, %s19, 1
          %s355 = smul.addr %s354, 8
          %s356 = scalar_lea.vmem %s0, %s355
        $region60: #{tpu_custom_call.1} parent=55 // pred_fallthru
          _
      $region56: #{tpu_custom_call.1} parent=5 // pred_fallthru
        _
      %p357 = scmp.le.s32.totalorder 1, %s19
      %p358 = scmp.lt.s32.totalorder %s19, 3
      %p359 = pnand %p357, %p358
      %p360 = pneg %p359
      // Predicated region
      $region61: #{tpu_custom_call.1} parent=5 // pred_check
        _
      $region62: #{tpu_custom_call.1} parent=5 // pred_check_branch
        %362 = sbr.rel (%p359) target = $region64
      $region63: #{tpu_custom_call.1} parent=5 // pred_region
        %s363 = ssub.s32 %s19, 1
        // Predicated region
        $region65: #{tpu_custom_call.1} parent=63 // pred_check
          %p364 = pneg %p150
        $region66: #{tpu_custom_call.1} parent=63 // pred_check_branch
          %366 = sbr.rel (%p364) target = $region68
        $region67: #{tpu_custom_call.1} parent=63 // pred_region
          %367 = dma.done [#allocation3], 1024
        $region68: #{tpu_custom_call.1} parent=63 // pred_fallthru
          _
        // Predicated region
        $region69: #{tpu_custom_call.1} parent=63 // pred_check
          %p368 = pneg %p234
        $region70: #{tpu_custom_call.1} parent=63 // pred_check_branch
          %370 = sbr.rel (%p368) target = $region72
        $region71: #{tpu_custom_call.1} parent=63 // pred_region
          %371 = dma.done [#allocation5], 1024
        $region72: #{tpu_custom_call.1} parent=63 // pred_fallthru
          _
        %p372 = scmp.lt.s32.totalorder %s24, 1
        %s373 = scalar_select %p372, %s24, 1
        %s374 = smul.addr %s373, 8
        %s375 = scalar_lea.vmem %s0, %s374
        %p376 = pneg %p45
        %p377 = pneg %p42
        %p378 = pneg %p66
        %p379 = pneg %p63
        %p380 = pneg %p87
        %p381 = pneg %p84
        %p382 = pneg %p108
        %p383 = pneg %p105
        %p384 = pneg %p129
        %p385 = pneg %p126
        %p386 = pneg %p150
        %p387 = pneg %p147
        %p388 = pneg %p171
        %p389 = pneg %p168
        %p390 = pneg %p192
        %p391 = pneg %p189
        %p392 = pneg %p213
        %p393 = pneg %p210
        %p394 = pneg %p234
        %p395 = pneg %p231
        %p396 = pneg %p255
        %p397 = pneg %p252
        %p398 = pneg %p281
        %p399 = pneg %p278
        %p400 = scmp.lt.s32.totalorder %s24, 1
        %s401 = scalar_select %p400, %s24, 1
        %s402 = smul.addr %s401, 8
        %s403 = scalar_lea.vmem %s11, %s402
        %p404 = scmp.lt.s32.totalorder %s24, 1
        %s405 = scalar_select %p404, %s24, 1
        %s406 = smul.addr %s405, 8
        %s407 = scalar_lea.vmem %s0, %s406
        %p408 = scmp.lt.s32.totalorder %s24, 1
        %s409 = scalar_select %p408, %s24, 1
        %s410 = smul.addr %s409, 8
        %s411 = scalar_lea.vmem %s11, %s410
        %v413 = vld [vmem:[%s407] sm:$0xff]
        %v414 = vpack.c.bf16 %v413, %v413
        %v415 = vld [vmem:[%s1] sm:$0xf]
        %v416 = vld [vmem:[%s2] sm:$0x1]
        %v418 = vlaneseq
        %v419 = vshrl.u32 %v418, 7
        %v420 = vsub.s32 0, %v419
        %v421 = vrot.slane %v416, %v420
        %vm423 = vcmask 64512
        %v425 = vsel %vm423, %v414, 0
        %vm427 = vcmask 1043456
        %v429 = vsel %vm427, %v415, 0
        %431 = vmatprep.subr.bf16.mxu0 0
        %432 = vmatpush1.bf16.msra.mxu0 %v429
        %433 = vmatprep.subr.bf16.mxu0 0
        %434 = vmatpush1.bf16.msra.mxu0 0
        %435 = vmatprep.subr.bf16.mxu0 0
        %436 = vmatpush1.bf16.msra.mxu0 0
        %437 = vmatprep.subr.bf16.mxu0 0
        %438 = vmatpush1.bf16.msra.mxu0 0
        %439 = vmatprep.subr.bf16.mxu0 0
        %440 = vmatpush1.bf16.msra.mxu0 0
        %441 = vmatprep.subr.bf16.mxu0 0
        %442 = vmatpush1.bf16.msra.mxu0 0
        %443 = vmatprep.subr.bf16.mxu0 0
        %444 = vmatpush1.bf16.msra.mxu0 0
        %445 = vmatprep.subr.bf16.mxu0 0
        %446 = vmatpush1.bf16.msra.mxu0 0
        %447 = vmatprep.subr.bf16.mxu0 0
        %448 = vmatpush1.bf16.msra.mxu0 0
        %449 = vmatprep.subr.bf16.mxu0 0
        %450 = vmatpush1.bf16.msra.mxu0 0
        %451 = vmatprep.subr.bf16.mxu0 0
        %452 = vmatpush1.bf16.msra.mxu0 0
        %453 = vmatprep.subr.bf16.mxu0 0
        %454 = vmatpush1.bf16.msra.mxu0 0
        %455 = vmatprep.subr.bf16.mxu0 0
        %456 = vmatpush1.bf16.msra.mxu0 0
        %457 = vmatprep.subr.bf16.mxu0 0
        %458 = vmatpush1.bf16.msra.mxu0 0
        %459 = vmatprep.subr.bf16.mxu0 0
        %460 = vmatpush1.bf16.msra.mxu0 0
        %461 = vmatprep.subr.bf16.mxu0 0
        %462 = vmatpush1.bf16.msra.mxu0 0
        %463 = vmatprep.mubr.bf16.mxu0 0
        %464 = vmatmul.mubr.bf16.gmra.mrb[0].mxu0 %v425
        %v465 = vpop.f32.mrb[0].mxu0
        %v466 = vadd.f32 %v421, %v465
        %v467 = vpop.f32.mrb[0].mxu0
        %v468 = vpop.f32.mrb[0].mxu0
        %v469 = vpop.f32.mrb[0].mxu0
        %470 = vdwg.mxu0
        %v471 = vld [vmem:[%s3] sm:$0x1]
        %v472 = vld [vmem:[%s4] sm:$0x1]
        %473 = vadd.xlane.f32.xlu0 %v466
        %v474 = vpop.xlane.xlu0 %473
        %v475 = vrcp.pop 128.0
        %v476 = vmul.f32 %v474, %v475
        %v477 = vmul.f32 %v466, %v466
        %478 = vadd.xlane.f32.xlu0 %v477
        %v479 = vpop.xlane.xlu0 %478
        %v480 = vmul.f32 %v479, %v475
        %v481 = vmul.f32 %v476, %v476
        %v482 = vsub.f32 %v480, %v481
        %v483 = vadd.f32 %v482, 1e-05
        %v484 = vrsqrt.pop %v483
        %v485 = vsub.f32 %v466, %v476
        %v486 = vmul.f32 %v485, %v484
        %v488 = vlaneseq
        %v489 = vshrl.u32 %v488, 7
        %v490 = vsub.s32 0, %v489
        %v491 = vrot.slane %v471, %v490
        %v493 = vmul.f32 %v486, %v491
        %v495 = vlaneseq
        %v496 = vshrl.u32 %v495, 7
        %v497 = vsub.s32 0, %v496
        %v498 = vrot.slane %v472, %v497
        %v500 = vadd.f32 %v493, %v498
        %v501 = vmax.f32 %v500, 0.0
        %v502 = vpack.c.bf16 %v501, %v501
        %v503 = vld [vmem:[#allocation2] sm:$0xf]
        %v504 = vld [vmem:[#allocation2 + $0x4] sm:$0xf]
        %v505 = vld [vmem:[#allocation2 + $0x8] sm:$0xf]
        %v506 = vld [vmem:[#allocation2 + $0xc] sm:$0xf]
        %v507 = vld [vmem:[#allocation2 + $0x10] sm:$0xf]
        %v508 = vld [vmem:[#allocation2 + $0x14] sm:$0xf]
        %v509 = vld [vmem:[#allocation2 + $0x18] sm:$0xf]
        %v510 = vld [vmem:[#allocation2 + $0x1c] sm:$0xf]
        %v511 = vld [vmem:[#allocation2 + $0x20] sm:$0xf]
        %v512 = vld [vmem:[#allocation2 + $0x24] sm:$0xf]
        %v513 = vld [vmem:[#allocation2 + $0x28] sm:$0xf]
        %v514 = vld [vmem:[#allocation2 + $0x2c] sm:$0xf]
        %v515 = vld [vmem:[#allocation2 + $0x30] sm:$0xf]
        %v516 = vld [vmem:[#allocation2 + $0x34] sm:$0xf]
        %v517 = vld [vmem:[#allocation2 + $0x38] sm:$0xf]
        %v518 = vld [vmem:[#allocation2 + $0x3c] sm:$0xf]
        %v519 = vld [vmem:[%s6] sm:$0x1]
        %v521 = vlaneseq
        %v522 = vshrl.u32 %v521, 7
        %v523 = vsub.s32 0, %v522
        %v524 = vrot.slane %v519, %v523
        %v542 = vunpack.c.l.b16 %v503
        %v543 = vunpack.c.l.b16 %v504
        %v544 = vunpack.c.l.b16 %v505
        %v545 = vunpack.c.l.b16 %v506
        %v546 = vunpack.c.l.b16 %v507
        %v547 = vunpack.c.l.b16 %v508
        %v548 = vunpack.c.l.b16 %v509
        %v549 = vunpack.c.l.b16 %v510
        %v550 = vunpack.c.l.b16 %v511
        %v551 = vunpack.c.l.b16 %v512
        %v552 = vunpack.c.l.b16 %v513
        %v553 = vunpack.c.l.b16 %v514
        %v554 = vunpack.c.l.b16 %v515
        %v555 = vunpack.c.l.b16 %v516
        %v556 = vunpack.c.l.b16 %v517
        %v557 = vunpack.c.l.b16 %v518
        %v558 = vpack.c.b16 %v543, %v542
        %v559 = vpack.c.b16 %v545, %v544
        %v560 = vpack.c.b16 %v547, %v546
        %v561 = vpack.c.b16 %v549, %v548
        %v562 = vpack.c.b16 %v551, %v550
        %v563 = vpack.c.b16 %v553, %v552
        %v564 = vpack.c.b16 %v555, %v554
        %v565 = vpack.c.b16 %v557, %v556
        %574 = vmatprep.subr.bf16.mxu0 0
        %575 = vmatpush1.bf16.msra.mxu0 %v558
        %576 = vmatprep.subr.bf16.mxu0 0
        %577 = vmatpush1.bf16.msra.mxu0 %v559
        %578 = vmatprep.subr.bf16.mxu0 0
        %579 = vmatpush1.bf16.msra.mxu0 %v560
        %580 = vmatprep.subr.bf16.mxu0 0
        %581 = vmatpush1.bf16.msra.mxu0 %v561
        %582 = vmatprep.subr.bf16.mxu0 0
        %583 = vmatpush1.bf16.msra.mxu0 %v562
        %584 = vmatprep.subr.bf16.mxu0 0
        %585 = vmatpush1.bf16.msra.mxu0 %v563
        %586 = vmatprep.subr.bf16.mxu0 0
        %587 = vmatpush1.bf16.msra.mxu0 %v564
        %588 = vmatprep.subr.bf16.mxu0 0
        %589 = vmatpush1.bf16.msra.mxu0 %v565
        %590 = vmatprep.subr.bf16.mxu0 0
        %591 = vmatpush1.bf16.msra.mxu0 0
        %592 = vmatprep.subr.bf16.mxu0 0
        %593 = vmatpush1.bf16.msra.mxu0 0
        %594 = vmatprep.subr.bf16.mxu0 0
        %595 = vmatpush1.bf16.msra.mxu0 0
        %596 = vmatprep.subr.bf16.mxu0 0
        %597 = vmatpush1.bf16.msra.mxu0 0
        %598 = vmatprep.subr.bf16.mxu0 0
        %599 = vmatpush1.bf16.msra.mxu0 0
        %600 = vmatprep.subr.bf16.mxu0 0
        %601 = vmatpush1.bf16.msra.mxu0 0
        %602 = vmatprep.subr.bf16.mxu0 0
        %603 = vmatpush1.bf16.msra.mxu0 0
        %604 = vmatprep.subr.bf16.mxu0 0
        %605 = vmatpush1.bf16.msra.mxu0 0
        %606 = vmatprep.mubr.bf16.mxu0 0
        %607 = vmatmul.mubr.bf16.gmra.mrb[0].mxu0 %v502
        %v608 = vpop.f32.mrb[0].mxu0
        %v609 = vadd.f32 %v524, %v608
        %v610 = vpop.f32.mrb[0].mxu0
        %v611 = vpop.f32.mrb[0].mxu0
        %v612 = vpop.f32.mrb[0].mxu0
        %613 = vdwg.mxu0
        %v614 = vld [vmem:[%s7] sm:$0x1]
        %v615 = vld [vmem:[%s8] sm:$0x1]
        %616 = vadd.xlane.f32.xlu0 %v609
        %v617 = vpop.xlane.xlu0 %616
        %v618 = vmul.f32 %v617, %v475
        %v619 = vmul.f32 %v609, %v609
        %620 = vadd.xlane.f32.xlu0 %v619
        %v621 = vpop.xlane.xlu0 %620
        %v622 = vmul.f32 %v621, %v475
        %v623 = vmul.f32 %v618, %v618
        %v624 = vsub.f32 %v622, %v623
        %v625 = vadd.f32 %v624, 1e-05
        %v626 = vrsqrt.pop %v625
        %v627 = vsub.f32 %v609, %v618
        %v628 = vmul.f32 %v627, %v626
        %v630 = vlaneseq
        %v631 = vshrl.u32 %v630, 7
        %v632 = vsub.s32 0, %v631
        %v633 = vrot.slane %v614, %v632
        %v635 = vmul.f32 %v628, %v633
        %v637 = vlaneseq
        %v638 = vshrl.u32 %v637, 7
        %v639 = vsub.s32 0, %v638
        %v640 = vrot.slane %v615, %v639
        %v642 = vadd.f32 %v635, %v640
        %v643 = vmax.f32 %v642, 0.0
        %v644 = vpack.c.bf16 %v643, %v643
        %v645 = vld [vmem:[#allocation4] sm:$0xf]
        %v646 = vld [vmem:[#allocation4 + $0x4] sm:$0xf]
        %v647 = vld [vmem:[#allocation4 + $0x8] sm:$0xf]
        %v648 = vld [vmem:[#allocation4 + $0xc] sm:$0xf]
        %v649 = vld [vmem:[#allocation4 + $0x10] sm:$0xf]
        %v650 = vld [vmem:[#allocation4 + $0x14] sm:$0xf]
        %v651 = vld [vmem:[#allocation4 + $0x18] sm:$0xf]
        %v652 = vld [vmem:[#allocation4 + $0x1c] sm:$0xf]
        %v653 = vld [vmem:[#allocation4 + $0x20] sm:$0xf]
        %v654 = vld [vmem:[#allocation4 + $0x24] sm:$0xf]
        %v655 = vld [vmem:[#allocation4 + $0x28] sm:$0xf]
        %v656 = vld [vmem:[#allocation4 + $0x2c] sm:$0xf]
        %v657 = vld [vmem:[#allocation4 + $0x30] sm:$0xf]
        %v658 = vld [vmem:[#allocation4 + $0x34] sm:$0xf]
        %v659 = vld [vmem:[#allocation4 + $0x38] sm:$0xf]
        %v660 = vld [vmem:[#allocation4 + $0x3c] sm:$0xf]
        %v661 = vld [vmem:[%s10] sm:$0x1]
        %v663 = vlaneseq
        %v664 = vshrl.u32 %v663, 7
        %v665 = vsub.s32 0, %v664
        %v666 = vrot.slane %v661, %v665
        %v684 = vunpack.c.l.b16 %v645
        %v685 = vunpack.c.l.b16 %v646
        %v686 = vunpack.c.l.b16 %v647
        %v687 = vunpack.c.l.b16 %v648
        %v688 = vunpack.c.l.b16 %v649
        %v689 = vunpack.c.l.b16 %v650
        %v690 = vunpack.c.l.b16 %v651
        %v691 = vunpack.c.l.b16 %v652
        %v692 = vunpack.c.l.b16 %v653
        %v693 = vunpack.c.l.b16 %v654
        %v694 = vunpack.c.l.b16 %v655
        %v695 = vunpack.c.l.b16 %v656
        %v696 = vunpack.c.l.b16 %v657
        %v697 = vunpack.c.l.b16 %v658
        %v698 = vunpack.c.l.b16 %v659
        %v699 = vunpack.c.l.b16 %v660
        %v700 = vpack.c.b16 %v685, %v684
        %v701 = vpack.c.b16 %v687, %v686
        %v702 = vpack.c.b16 %v689, %v688
        %v703 = vpack.c.b16 %v691, %v690
        %v704 = vpack.c.b16 %v693, %v692
        %v705 = vpack.c.b16 %v695, %v694
        %v706 = vpack.c.b16 %v697, %v696
        %v707 = vpack.c.b16 %v699, %v698
        %716 = vmatprep.subr.bf16.mxu0 0
        %717 = vmatpush1.bf16.msra.mxu0 %v700
        %718 = vmatprep.subr.bf16.mxu0 0
        %719 = vmatpush1.bf16.msra.mxu0 %v701
        %720 = vmatprep.subr.bf16.mxu0 0
        %721 = vmatpush1.bf16.msra.mxu0 %v702
        %722 = vmatprep.subr.bf16.mxu0 0
        %723 = vmatpush1.bf16.msra.mxu0 %v703
        %724 = vmatprep.subr.bf16.mxu0 0
        %725 = vmatpush1.bf16.msra.mxu0 %v704
        %726 = vmatprep.subr.bf16.mxu0 0
        %727 = vmatpush1.bf16.msra.mxu0 %v705
        %728 = vmatprep.subr.bf16.mxu0 0
        %729 = vmatpush1.bf16.msra.mxu0 %v706
        %730 = vmatprep.subr.bf16.mxu0 0
        %731 = vmatpush1.bf16.msra.mxu0 %v707
        %732 = vmatprep.subr.bf16.mxu0 0
        %733 = vmatpush1.bf16.msra.mxu0 0
        %734 = vmatprep.subr.bf16.mxu0 0
        %735 = vmatpush1.bf16.msra.mxu0 0
        %736 = vmatprep.subr.bf16.mxu0 0
        %737 = vmatpush1.bf16.msra.mxu0 0
        %738 = vmatprep.subr.bf16.mxu0 0
        %739 = vmatpush1.bf16.msra.mxu0 0
        %740 = vmatprep.subr.bf16.mxu0 0
        %741 = vmatpush1.bf16.msra.mxu0 0
        %742 = vmatprep.subr.bf16.mxu0 0
        %743 = vmatpush1.bf16.msra.mxu0 0
        %744 = vmatprep.subr.bf16.mxu0 0
        %745 = vmatpush1.bf16.msra.mxu0 0
        %746 = vmatprep.subr.bf16.mxu0 0
        %747 = vmatpush1.bf16.msra.mxu0 0
        %748 = vmatprep.mubr.bf16.mxu0 0
        %749 = vmatmul.mubr.bf16.gmra.mrb[0].mxu0 %v644
        %v750 = vpop.f32.mrb[0].mxu0
        %v751 = vadd.f32 %v666, %v750
        %v752 = vpop.f32.mrb[0].mxu0
        %v753 = vpop.f32.mrb[0].mxu0
        %v754 = vpop.f32.mrb[0].mxu0
        %755 = vdwg.mxu0
        %v756 = vmul.f32 %v751, 0.5
        %v757 = vtanh.pop %v756
        %v758 = vmul.f32 %v757, 0.5
        %v759 = vadd.f32 %v758, 0.5
        %vm760 = vcmask 31744
        %761 = vst.msk [vmem:[%s411] sm:$0xff] %vm760, %v759
        %p762 = scmp.lt.s32.totalorder %s24, 1
        %s763 = scalar_select %p762, %s24, 1
        %s764 = smul.addr %s763, 8
        %s765 = scalar_lea.vmem %s11, %s764
        // Predicated region
        $region73: #{tpu_custom_call.1} parent=63 // pred_check
          %p766 = pneg %p278
        $region74: #{tpu_custom_call.1} parent=63 // pred_check_branch
          %768 = sbr.rel (%p766) target = $region76
        $region75: #{tpu_custom_call.1} parent=63 // pred_region
          _
        $region76: #{tpu_custom_call.1} parent=63 // pred_fallthru
          _
      $region64: #{tpu_custom_call.1} parent=5 // pred_fallthru
        _
      %p769 = scmp.le.s32.totalorder 2, %s19
      // Predicated region
      $region77: #{tpu_custom_call.1} parent=5 // pred_check
        %p770 = pneg %p769
      $region78: #{tpu_custom_call.1} parent=5 // pred_check_branch
        %772 = sbr.rel (%p770) target = $region80
      $region79: #{tpu_custom_call.1} parent=5 // pred_region
        %s773 = ssub.s32 %s19, 2
        // Predicated region
        $region81: #{tpu_custom_call.1} parent=79 // pred_check
          %p774 = pneg %p284
        $region82: #{tpu_custom_call.1} parent=79 // pred_check_branch
          %776 = sbr.rel (%p774) target = $region84
        $region83: #{tpu_custom_call.1} parent=79 // pred_region
          %p777 = scmp.lt.s32.totalorder %s25, 1
          %s778 = scalar_select %p777, %s25, 1
          %s779 = smul.addr %s778, 8
          %s780 = scalar_lea.vmem %s11, %s779
        $region84: #{tpu_custom_call.1} parent=79 // pred_fallthru
          _
      $region80: #{tpu_custom_call.1} parent=5 // pred_fallthru
        _
    $region6: #{tpu_custom_call.1} parent=1 // loop_footer
      %s23 = sadd.s32 1, %s19
    $region7: #{tpu_custom_call.1} parent=1 // loop_footer_branch
      %18 = sbr.rel target = $region3
    $region8: #{tpu_custom_call.1} parent=1 // loop_exit
      _
    %781 = vsyncpa [#allocation3], 1
    %s782 = scalar_lea.sflag [#allocation3], 1
    %783 = vsyncpa %s782, 1
    %784 = vsyncpa [#allocation5], 1

</llo_original>
